<compile_context>
chip_gen: v5e
topology: v5e:2x2
jax: 0.10.0
libtpu: 0.0.40
codegen_flags: <defaults>
</compile_context>

<pallas_src>
import numpy as np
import jax
import jax.numpy as jnp
from jax.experimental import pallas as pl
from jax.experimental.pallas import tpu as pltpu


_VMEM_LIMIT = 32 * 1024 * 1024   # explicit scoped-VMEM budget; safe on v5e/v6e/v7x


# ----------------------------------------------------------------------------
# tiling helper (static, shape-derived)
# ----------------------------------------------------------------------------
def _pick_tile(total, align, max_tile):
    """Tile length for one axis: a multiple of `align` (or the full extent),
    capped at `max_tile`.  The tile does NOT have to divide `total`: grids use
    pl.cdiv and the partial last block is handled by Pallas; out-of-bounds
    padding only feeds output elements that are discarded on write."""
    if total <= max_tile:
        return total                      # full-extent block is always legal
    t = max_tile - (max_tile % align)
    return max(t, align)


# ----------------------------------------------------------------------------
# Kernel 1: fused mask logits
#   logits[b, q, hw] = sum_k Wq[q, k] * patchesT[b, k, hw] + bq[q]
#   (patch embedding + query projection fused into a single (Q,K)x(K,HW) matmul)
# ----------------------------------------------------------------------------
def _fused_logits_kernel(wq_ref, bq_ref, x_ref, o_ref):
    # wq_ref: (Q, K) bf16   bq_ref: (Q, 1) f32   x_ref: (1, K, THW) bf16
    # o_ref:  (1, Q, THW) bf16
    acc = jnp.dot(wq_ref[...], x_ref[0], preferred_element_type=jnp.float32)
    o_ref[0] = (acc + bq_ref[...]).astype(o_ref.dtype)


def fused_mask_logits(wq, bq, patches_t):
    # wq: (Q, K) bf16, bq: (Q, 1) f32, patches_t: (B, K, HW) bf16 -> (B, Q, HW) bf16
    Q, K = wq.shape
    B, _, HW = patches_t.shape
    thw = _pick_tile(HW, 128, 16384)      # large lane-dense tile, ~4-5 MiB VMEM total
    grid = (B, pl.cdiv(HW, thw))
    return pl.pallas_call(
        _fused_logits_kernel,
        out_shape=jax.ShapeDtypeStruct((B, Q, HW), jnp.bfloat16),
        grid=grid,
        in_specs=[
            pl.BlockSpec((Q, K), lambda b, t: (0, 0)),
            pl.BlockSpec((Q, 1), lambda b, t: (0, 0)),
            pl.BlockSpec((1, K, thw), lambda b, t: (b, 0, t)),
        ],
        out_specs=pl.BlockSpec((1, Q, thw), lambda b, t: (b, 0, t)),
        compiler_params=pltpu.CompilerParams(
            dimension_semantics=("parallel", "parallel"),
            vmem_limit_bytes=_VMEM_LIMIT),
    )(wq, bq, patches_t)


# ----------------------------------------------------------------------------
# Kernel 2: bilinear upsample (align_corners=False) as two matmuls
#   out[n, h_tile] = A[h_tile] @ X[n] @ B^T      A: (H, Hc)   B^T: (Wc, W)
#   tiled over (n, h_tile); X[n] stays VMEM-resident across h tiles.
# ----------------------------------------------------------------------------
def _bilinear_kernel(a_ref, bt_ref, x_ref, o_ref):
    # a_ref: (TH, Hc) bf16  bt_ref: (Wc, W) bf16  x_ref: (1, Hc, Wc) bf16
    # o_ref: (1, TH, W) f32
    y = jnp.dot(a_ref[...], x_ref[0], preferred_element_type=jnp.float32)     # (TH, Wc)
    o_ref[0] = jnp.dot(y.astype(jnp.bfloat16), bt_ref[...],
                       preferred_element_type=jnp.float32)                     # (TH, W)


def bilinear_upsample(x, wh, wwT):
    # x: (N, Hc, Wc) bf16, wh: (H, Hc) bf16, wwT: (Wc, W) bf16 -> (N, H, W) f32
    N, Hc, Wc = x.shape
    H = wh.shape[0]
    W = wwT.shape[1]
    # static VMEM budget: double-buffered f32 output block + (2x) bf16 wwT
    budget = 24 * 1024 * 1024
    out_bytes_per_row = W * 4 * 2
    bt_bytes = Wc * W * 2 * 2
    max_rows = max(8, (budget - bt_bytes) // out_bytes_per_row)
    th = _pick_tile(H, 8, min(512, int(max_rows)))
    grid = (N, pl.cdiv(H, th))
    return pl.pallas_call(
        _bilinear_kernel,
        out_shape=jax.ShapeDtypeStruct((N, H, W), jnp.float32),
        grid=grid,
        in_specs=[
            pl.BlockSpec((th, Hc), lambda n, h: (h, 0)),
            pl.BlockSpec((Wc, W), lambda n, h: (0, 0)),
            pl.BlockSpec((1, Hc, Wc), lambda n, h: (n, 0, 0)),
        ],
        out_specs=pl.BlockSpec((1, th, W), lambda n, h: (n, h, 0)),
        compiler_params=pltpu.CompilerParams(
            dimension_semantics=("parallel", "parallel"),
            vmem_limit_bytes=_VMEM_LIMIT),
    )(wh, wwT, x)


# ----------------------------------------------------------------------------
# Static glue: PyTorch-style bilinear (align_corners=False) weight matrices
# (pure numpy -> baked in as constants at trace time, no per-call transpose)
# ----------------------------------------------------------------------------
def bilinear_weight_matrix_np(in_size, out_size):
    scale = in_size / out_size
    o = np.arange(out_size)
    src = (o + 0.5) * scale - 0.5
    src = np.clip(src, 0.0, None)               # PyTorch clamps negative source idx
    i0 = np.minimum(np.floor(src).astype(np.int64), in_size - 1)
    i1 = np.minimum(i0 + 1, in_size - 1)
    lam = (src - i0).astype(np.float32)
    W = np.zeros((out_size, in_size), dtype=np.float32)
    W[o, i0] += (1.0 - lam)
    W[o, i1] += lam
    return W


# ----------------------------------------------------------------------------
# Full forward
# ----------------------------------------------------------------------------
PATCH = 4          # masks_queries_logits are produced at 1/4 resolution
EMBED_DIM = 32     # synthetic mask-embedding dim
NUM_QUERIES = 16   # synthetic query count (real model: 100)


def init_params(key):
    k1, k2, k3 = jax.random.split(key, 3)
    w_patch = jax.random.normal(k1, (3 * PATCH * PATCH, EMBED_DIM), jnp.float32) * 0.05
    b_patch = jax.random.normal(k2, (1, EMBED_DIM), jnp.float32) * 0.01
    queries = jax.random.normal(k3, (NUM_QUERIES, EMBED_DIM), jnp.float32) * 0.1
    return {"w_patch": w_patch, "b_patch": b_patch, "queries": queries}


def model_forward(params, pixel_values):
    # pixel_values: (B, 3, H, W)  NCHW, float32
    B, C_in, H, W = pixel_values.shape
    Hc, Wc = H // PATCH, W // PATCH
    HW = Hc * Wc
    K = C_in * PATCH * PATCH

    # -- algebraic fusion of patch embedding + query projection (exact, in f32) --
    #    Wq (Q, K) = queries @ w_patch.T ; bq (Q, 1) = queries @ b_patch.T
    wq = jnp.dot(params["queries"], params["w_patch"].T).astype(jnp.bfloat16)  # (Q, K)
    bq = jnp.dot(params["queries"], params["b_patch"].T)                       # (Q, 1) f32

    # -- patchify to channel-first patches (B, K, Hc*Wc); K order = (c, ph, pw) --
    #    cast to bf16 BEFORE the transpose to halve its HBM traffic
    xb = pixel_values.astype(jnp.bfloat16)
    x = xb.reshape(B, C_in, Hc, PATCH, Wc, PATCH)
    x = jnp.transpose(x, (0, 1, 3, 5, 2, 4))                                   # (B,C,P,P,Hc,Wc)
    patches_t = x.reshape(B, K, HW)                                            # bf16

    # -- fused masks_queries_logits (Pallas, HW lane-dense, tiled over (B, HW)) --
    logits = fused_mask_logits(wq, bq, patches_t)                              # (B, Q, HW) bf16
    logits = logits.reshape(B * NUM_QUERIES, Hc, Wc)                           # pure reshape

    # -- F.interpolate(..., size=(H, W), mode='bilinear', align_corners=False) --
    wh = jnp.asarray(bilinear_weight_matrix_np(Hc, H), dtype=jnp.bfloat16)     # (H, Hc)
    wwT = jnp.asarray(bilinear_weight_matrix_np(Wc, W).T, dtype=jnp.bfloat16)  # (Wc, W)
    up = bilinear_upsample(logits, wh, wwT)                                    # (B*Q, H, W) f32
    return up.reshape(B, NUM_QUERIES, H, W)


if __name__ == "__main__":
    key = jax.random.PRNGKey(0)
    k_params, k_input = jax.random.split(key)
    params = init_params(k_params)

    # small NCHW input, divisible by the patch stride
    pixel_values = jax.random.normal(k_input, (2, 3, 16, 16), jnp.float32)

    out = jax.jit(model_forward)(params, pixel_values)
    out = jax.block_until_ready(out)

    assert out.shape == (2, NUM_QUERIES, 16, 16), out.shape
    assert out.dtype == jnp.float32
    assert bool(jnp.all(jnp.isfinite(out)))
    print("KERNEL_OK")
</pallas_src>

<mosaic_0001>
module attributes {stable_mosaic.version = 11 : i64} {
  func.func @_fused_logits_kernel(%arg0: i32, %arg1: i32, %arg2: memref<16x48xbf16, #tpu.memory_space<vmem>>, %arg3: memref<16x1xf32, #tpu.memory_space<vmem>>, %arg4: memref<1x48x16xbf16, #tpu.memory_space<vmem>>, %arg5: memref<1x16x16xbf16, #tpu.memory_space<vmem>>) attributes {dimension_semantics = [#tpu.dimension_semantics<parallel>, #tpu.dimension_semantics<parallel>], iteration_bounds = array<i64: 2, 1>, scalar_prefetch = 0 : i64, scratch_operands = 0 : i64, tpu.core_type = #tpu.core_type<tc>, window_params = [{pipeline_mode = #tpu.pipeline_mode<synchronous>, transform_indices = @transform_0, window_bounds = array<i64: 16, 48>}, {pipeline_mode = #tpu.pipeline_mode<synchronous>, transform_indices = @transform_1, window_bounds = array<i64: 16, 1>}, {transform_indices = @transform_2, window_bounds = array<i64: 1, 48, 16>}, {transform_indices = @transform_3, window_bounds = array<i64: 1, 16, 16>}]} {
    %c0 = arith.constant 0 : index
    %c0_0 = arith.constant 0 : index
    %0 = vector.load %arg2[%c0, %c0_0] : memref<16x48xbf16, #tpu.memory_space<vmem>>, vector<16x48xbf16>
    %c0_1 = arith.constant 0 : index
    %c0_2 = arith.constant 0 : index
    %c0_3 = arith.constant 0 : index
    %1 = vector.load %arg4[%c0_1, %c0_2, %c0_3] : memref<1x48x16xbf16, #tpu.memory_space<vmem>>, vector<1x48x16xbf16>
    %2 = vector.shape_cast %1 : vector<1x48x16xbf16> to vector<48x16xbf16>
    %cst = arith.constant dense<0.000000e+00> : vector<16x16xf32>
    %3 = tpu.matmul %0, %2, %cst {dimension_numbers = #tpu.dot_dimension_numbers<[1], [0], [0], [1], [0, 0, 1, 1], [], []>} : vector<16x48xbf16>, vector<48x16xbf16>, vector<16x16xf32> -> vector<16x16xf32>
    %c0_4 = arith.constant 0 : index
    %c0_5 = arith.constant 0 : index
    %4 = vector.load %arg3[%c0_4, %c0_5] : memref<16x1xf32, #tpu.memory_space<vmem>>, vector<16x1xf32>
    %5 = vector.broadcast %4 : vector<16x1xf32> to vector<16x16xf32>
    %6 = arith.addf %3, %5 : vector<16x16xf32>
    %7 = arith.truncf %6 : vector<16x16xf32> to vector<16x16xbf16>
    %c0_6 = arith.constant 0 : index
    %c0_7 = arith.constant 0 : index
    %c0_8 = arith.constant 0 : index
    %8 = vector.load %arg5[%c0_6, %c0_7, %c0_8] : memref<1x16x16xbf16, #tpu.memory_space<vmem>>, vector<1x16x16xbf16>
    %9 = vector.shape_cast %8 : vector<1x16x16xbf16> to vector<16x16xbf16>
    %10 = vector.shape_cast %7 : vector<16x16xbf16> to vector<1x16x16xbf16>
    tpu.vector_store %arg5[%c0_6, %c0_7, %c0_8], %10 {strides = array<i32>} : memref<1x16x16xbf16, #tpu.memory_space<vmem>>, vector<1x16x16xbf16>,
    return
  }
  func.func @transform_0(%arg0: i32, %arg1: i32) -> (i32, i32) {
    %c0_i32 = arith.constant 0 : i32
    %c0_i32_0 = arith.constant 0 : i32
    %c0_i32_1 = arith.constant 0 : i32
    return %c0_i32, %c0_i32_0 : i32, i32
  }
  func.func @transform_1(%arg0: i32, %arg1: i32) -> (i32, i32) {
    %c0_i32 = arith.constant 0 : i32
    %c0_i32_0 = arith.constant 0 : i32
    %c0_i32_1 = arith.constant 0 : i32
    return %c0_i32, %c0_i32_0 : i32, i32
  }
  func.func @transform_2(%arg0: i32, %arg1: i32) -> (i32, i32, i32) {
    %c0_i32 = arith.constant 0 : i32
    %c0_i32_0 = arith.constant 0 : i32
    return %arg0, %c0_i32, %arg1 : i32, i32, i32
  }
  func.func @transform_3(%arg0: i32, %arg1: i32) -> (i32, i32, i32) {
    %c0_i32 = arith.constant 0 : i32
    %c0_i32_0 = arith.constant 0 : i32
    return %arg0, %c0_i32, %arg1 : i32, i32, i32
  }
}

module attributes {stable_mosaic.version = 11 : i64} {
  func.func @_bilinear_kernel(%arg0: i32, %arg1: i32, %arg2: memref<16x4xbf16, #tpu.memory_space<vmem>>, %arg3: memref<4x16xbf16, #tpu.memory_space<vmem>>, %arg4: memref<1x4x4xbf16, #tpu.memory_space<vmem>>, %arg5: memref<1x16x16xf32, #tpu.memory_space<vmem>>) attributes {dimension_semantics = [#tpu.dimension_semantics<parallel>, #tpu.dimension_semantics<parallel>], iteration_bounds = array<i64: 32, 1>, scalar_prefetch = 0 : i64, scratch_operands = 0 : i64, tpu.core_type = #tpu.core_type<tc>, window_params = [{transform_indices = @transform_0, window_bounds = array<i64: 16, 4>}, {pipeline_mode = #tpu.pipeline_mode<synchronous>, transform_indices = @transform_1, window_bounds = array<i64: 4, 16>}, {transform_indices = @transform_2, window_bounds = array<i64: 1, 4, 4>}, {transform_indices = @transform_3, window_bounds = array<i64: 1, 16, 16>}]} {
    %c0 = arith.constant 0 : index
    %c0_0 = arith.constant 0 : index
    %0 = vector.load %arg2[%c0, %c0_0] : memref<16x4xbf16, #tpu.memory_space<vmem>>, vector<16x4xbf16>
    %c0_1 = arith.constant 0 : index
    %c0_2 = arith.constant 0 : index
    %c0_3 = arith.constant 0 : index
    %1 = vector.load %arg4[%c0_1, %c0_2, %c0_3] : memref<1x4x4xbf16, #tpu.memory_space<vmem>>, vector<1x4x4xbf16>
    %2 = vector.shape_cast %1 : vector<1x4x4xbf16> to vector<4x4xbf16>
    %cst = arith.constant dense<0.000000e+00> : vector<16x4xf32>
    %3 = tpu.matmul %0, %2, %cst {dimension_numbers = #tpu.dot_dimension_numbers<[1], [0], [0], [1], [0, 0, 1, 1], [], []>} : vector<16x4xbf16>, vector<4x4xbf16>, vector<16x4xf32> -> vector<16x4xf32>
    %4 = arith.truncf %3 : vector<16x4xf32> to vector<16x4xbf16>
    %c0_4 = arith.constant 0 : index
    %c0_5 = arith.constant 0 : index
    %5 = vector.load %arg3[%c0_4, %c0_5] : memref<4x16xbf16, #tpu.memory_space<vmem>>, vector<4x16xbf16>
    %cst_6 = arith.constant dense<0.000000e+00> : vector<16x16xf32>
    %6 = tpu.matmul %4, %5, %cst_6 {dimension_numbers = #tpu.dot_dimension_numbers<[1], [0], [0], [1], [0, 0, 1, 1], [], []>} : vector<16x4xbf16>, vector<4x16xbf16>, vector<16x16xf32> -> vector<16x16xf32>
    %c0_7 = arith.constant 0 : index
    %c0_8 = arith.constant 0 : index
    %c0_9 = arith.constant 0 : index
    %7 = vector.load %arg5[%c0_7, %c0_8, %c0_9] : memref<1x16x16xf32, #tpu.memory_space<vmem>>, vector<1x16x16xf32>
    %8 = vector.shape_cast %7 : vector<1x16x16xf32> to vector<16x16xf32>
    %9 = vector.shape_cast %6 : vector<16x16xf32> to vector<1x16x16xf32>
    tpu.vector_store %arg5[%c0_7, %c0_8, %c0_9], %9 {strides = array<i32>} : memref<1x16x16xf32, #tpu.memory_space<vmem>>, vector<1x16x16xf32>,
    return
  }
  func.func @transform_0(%arg0: i32, %arg1: i32) -> (i32, i32) {
    %c0_i32 = arith.constant 0 : i32
    %c0_i32_0 = arith.constant 0 : i32
    return %arg1, %c0_i32 : i32, i32
  }
  func.func @transform_1(%arg0: i32, %arg1: i32) -> (i32, i32) {
    %c0_i32 = arith.constant 0 : i32
    %c0_i32_0 = arith.constant 0 : i32
    %c0_i32_1 = arith.constant 0 : i32
    return %c0_i32, %c0_i32_0 : i32, i32
  }
  func.func @transform_2(%arg0: i32, %arg1: i32) -> (i32, i32, i32) {
    %c0_i32 = arith.constant 0 : i32
    %c0_i32_0 = arith.constant 0 : i32
    %c0_i32_1 = arith.constant 0 : i32
    return %arg0, %c0_i32, %c0_i32_0 : i32, i32, i32
  }
  func.func @transform_3(%arg0: i32, %arg1: i32) -> (i32, i32, i32) {
    %c0_i32 = arith.constant 0 : i32
    %c0_i32_0 = arith.constant 0 : i32
    return %arg0, %arg1, %c0_i32 : i32, i32, i32
  }
}

</mosaic_0001>

<llo_original>
// kernel: model_forward.2
$region0: #{model_forward.2}
  #allocation0 [shape = 'u32[]', space=smem, size = 0x4, offset = 0x4, fixed_abs, tag = 'smem constant byte address 0x4 - core index']
  #allocation1 [shape = 'u32[72,128]{1,0:T(1,128)}', space=vmem, size = 0x9000, scoped, tag = 'internal scratch']
  %s0 = inlined_call_operand.vmem [shape: bf16[16,48], index: 0, kind: input, shape index: {}]
  %s1 = inlined_call_operand.vmem [shape: f32[16,1], index: 1, kind: input, shape index: {}]
  %s2 = inlined_call_operand.vmem [shape: bf16[2,48,16], index: 2, kind: input, shape index: {}]
  %s3 = inlined_call_operand.vmem [shape: bf16[2,16,16], index: 3, kind: output, shape index: {}]
  %s4 = sld [smem:[#allocation0]]
  $region45: #{model_forward.2} parent=0
    _
  %s6 = ssub.s32 1, %s4
  %s7 = scalar_select 0, %s6, %s4
  loop: start=0, step=1, limit=4
  $region2: #{model_forward.2} parent=0 // loop_pre_header
    _
  $region3: #{model_forward.2} parent=0 // loop_header
    %s9 = sphi 0, %s13
    %p10 = scmp.ge.s32.totalorder %s9, 4
    %s16 = sphi 0, %s28
    %s17 = sphi 0, %s24
    %s18 = sphi 0, %s16
    %s19 = sphi 0, %s17
    %s20 = sphi 0, %s18
    %s21 = sphi 0, %s19
    %s29 = sphi 0, %s29
    %s31 = sphi 0, %s29
    %s32 = sphi 0, %s31
    %s46 = sphi 0, %s32
    %s50 = sphi 0, %s50
    %s52 = sphi 0, %s50
    %s53 = sphi 0, %s52
    %s67 = sphi 0, %s53
    %s75 = sphi 0, %s77
    %s78 = sphi 0, %s75
    %s79 = sphi 0, %s78
    %s95 = sphi 0, %s79
    %s103 = sphi 0, %s105
    %s106 = sphi 0, %s103
    %s107 = sphi 0, %s106
    %s123 = sphi 0, %s107
  $region4: #{model_forward.2} parent=0 // loop_header_branch
    %12 = sbr.rel (%p10) target = $region8
  $region5: #{model_forward.2} parent=0 // loop_body
    %s14 = ssub.s32 %s9, 1
    %s15 = ssub.s32 %s9, 2
    %s22 = sadd.s32 1, %s17
    %p23 = scmp.ge.s32.totalorder %s22, 1
    %s24 = scalar_select %p23, 0, %s22
    %s25 = sadd.s32 1, %s16
    %s26 = scalar_select %p23, %s25, %s16
    %p27 = scmp.ge.s32.totalorder %s26, 2
    %s28 = scalar_select %p27, 0, %s26
    %s30 = sadd.s32 %s29, 1
    %p33 = scmp.eq.s32.totalorder %s9, 1
    %p34 = scmp.ne.s32.totalorder %s29, %s31
    %p35 = scmp.eq.s32.totalorder %s9, 0
    %p36 = por %p34, %p35
    %p37 = scmp.ne.s32.totalorder %s29, %s31
    %p38 = scmp.eq.s32.totalorder %s14, 1
    %p39 = por %p37, %p38
    %p40 = scmp.ne.s32.totalorder %s31, %s32
    %p41 = scmp.eq.s32.totalorder %s14, 0
    %p42 = por %p40, %p41
    %p43 = scmp.ne.s32.totalorder %s31, %s32
    %p44 = scmp.eq.s32.totalorder %s15, 1
    %p45 = por %p43, %p44
    %p47 = scmp.ne.s32.totalorder %s32, %s46
    %p48 = scmp.eq.s32.totalorder %s15, 0
    %p49 = por %p47, %p48
    %s51 = sadd.s32 %s50, 1
    %p54 = scmp.eq.s32.totalorder %s9, 1
    %p55 = scmp.ne.s32.totalorder %s50, %s52
    %p56 = scmp.eq.s32.totalorder %s9, 0
    %p57 = por %p55, %p56
    %p58 = scmp.ne.s32.totalorder %s50, %s52
    %p59 = scmp.eq.s32.totalorder %s14, 1
    %p60 = por %p58, %p59
    %p61 = scmp.ne.s32.totalorder %s52, %s53
    %p62 = scmp.eq.s32.totalorder %s14, 0
    %p63 = por %p61, %p62
    %p64 = scmp.ne.s32.totalorder %s52, %s53
    %p65 = scmp.eq.s32.totalorder %s15, 1
    %p66 = por %p64, %p65
    %p68 = scmp.ne.s32.totalorder %s53, %s67
    %p69 = scmp.eq.s32.totalorder %s15, 0
    %p70 = por %p68, %p69
    %s71 = ssub.s32 %s16, %s28
    %s72 = ssub.s32 %s17, %s24
    %s73 = sor.u32 %s71, %s72
    %p74 = scmp.eq.s32.totalorder %s73, 0
    %s76 = sadd.s32 %s75, 1
    %s77 = scalar_select %p74, %s75, %s76
    %p80 = pneg %p74
    %p81 = scmp.eq.s32.totalorder %s9, 1
    %p82 = por %p80, %p81
    %p83 = scmp.ne.s32.totalorder %s75, %s78
    %p84 = scmp.eq.s32.totalorder %s9, 0
    %p85 = por %p83, %p84
    %p86 = scmp.ne.s32.totalorder %s75, %s78
    %p87 = scmp.eq.s32.totalorder %s14, 1
    %p88 = por %p86, %p87
    %p89 = scmp.ne.s32.totalorder %s78, %s79
    %p90 = scmp.eq.s32.totalorder %s14, 0
    %p91 = por %p89, %p90
    %p92 = scmp.ne.s32.totalorder %s78, %s79
    %p93 = scmp.eq.s32.totalorder %s15, 1
    %p94 = por %p92, %p93
    %p96 = scmp.ne.s32.totalorder %s79, %s95
    %p97 = scmp.eq.s32.totalorder %s15, 0
    %p98 = por %p96, %p97
    %s99 = ssub.s32 %s16, %s28
    %s100 = ssub.s32 %s17, %s24
    %s101 = sor.u32 %s99, %s100
    %p102 = scmp.eq.s32.totalorder %s101, 0
    %s104 = sadd.s32 %s103, 1
    %s105 = scalar_select %p102, %s103, %s104
    %p108 = pneg %p102
    %p109 = scmp.eq.s32.totalorder %s9, 1
    %p110 = por %p108, %p109
    %p111 = scmp.ne.s32.totalorder %s103, %s106
    %p112 = scmp.eq.s32.totalorder %s9, 0
    %p113 = por %p111, %p112
    %p114 = scmp.ne.s32.totalorder %s103, %s106
    %p115 = scmp.eq.s32.totalorder %s14, 1
    %p116 = por %p114, %p115
    %p117 = scmp.ne.s32.totalorder %s106, %s107
    %p118 = scmp.eq.s32.totalorder %s14, 0
    %p119 = por %p117, %p118
    %p120 = scmp.ne.s32.totalorder %s106, %s107
    %p121 = scmp.eq.s32.totalorder %s15, 1
    %p122 = por %p120, %p121
    %p124 = scmp.ne.s32.totalorder %s107, %s123
    %p125 = scmp.eq.s32.totalorder %s15, 0
    %p126 = por %p124, %p125
    %p127 = scmp.le.s32.totalorder 1, %s9
    %p128 = scmp.lt.s32.totalorder %s9, 3
    %p129 = pnand %p127, %p128
    %p130 = pneg %p129
    // Predicated region
    $region9: #{model_forward.2} parent=5 // pred_check
      _
    $region10: #{model_forward.2} parent=5 // pred_check_branch
      %132 = sbr.rel (%p129) target = $region12
    $region11: #{model_forward.2} parent=5 // pred_region
      %s133 = ssub.s32 %s9, 1
      // Predicated region
      $region13: #{model_forward.2} parent=11 // pred_check
        %p134 = pneg %p42
      $region14: #{model_forward.2} parent=11 // pred_check_branch
        %136 = sbr.rel (%p134) target = $region16
      $region15: #{model_forward.2} parent=11 // pred_region
        _
      $region16: #{model_forward.2} parent=11 // pred_fallthru
        _
      // Predicated region
      $region17: #{model_forward.2} parent=11 // pred_check
        %p137 = pneg %p63
      $region18: #{model_forward.2} parent=11 // pred_check_branch
        %139 = sbr.rel (%p137) target = $region20
      $region19: #{model_forward.2} parent=11 // pred_region
        _
      $region20: #{model_forward.2} parent=11 // pred_fallthru
        _
    $region12: #{model_forward.2} parent=5 // pred_fallthru
      _
    %p140 = scmp.lt.s32.totalorder %s9, 2
    // Predicated region
    $region21: #{model_forward.2} parent=5 // pred_check
      %p141 = pneg %p140
    $region22: #{model_forward.2} parent=5 // pred_check_branch
      %143 = sbr.rel (%p141) target = $region24
    $region23: #{model_forward.2} parent=5 // pred_region
      // Predicated region
      $region25: #{model_forward.2} parent=23 // pred_check
        %p144 = pneg %p85
      $region26: #{model_forward.2} parent=23 // pred_check_branch
        %146 = sbr.rel (%p144) target = $region28
      $region27: #{model_forward.2} parent=23 // pred_region
        %p147 = scmp.lt.s32.totalorder %s16, 1
        %s148 = scalar_select %p147, %s16, 1
        %p149 = scmp.lt.s32.totalorder %s17, 0
        %s150 = scalar_select %p149, %s17, 0
        %s151 = smul.addr %s148, 6
        %s152 = sadd.s32 %s150, %s151
        %s153 = smul.addr %s152, 4
        %s154 = scalar_lea.vmem %s2, %s153
      $region28: #{model_forward.2} parent=23 // pred_fallthru
        _
    $region24: #{model_forward.2} parent=5 // pred_fallthru
      _
    %p155 = scmp.le.s32.totalorder 1, %s9
    %p156 = scmp.lt.s32.totalorder %s9, 3
    %p157 = pnand %p155, %p156
    %p158 = pneg %p157
    // Predicated region
    $region29: #{model_forward.2} parent=5 // pred_check
      _
    $region30: #{model_forward.2} parent=5 // pred_check_branch
      %160 = sbr.rel (%p157) target = $region32
    $region31: #{model_forward.2} parent=5 // pred_region
      %s161 = ssub.s32 %s9, 1
      %p162 = pneg %p42
      %p163 = pneg %p39
      %p164 = pneg %p63
      %p165 = pneg %p60
      %p166 = scmp.lt.s32.totalorder %s18, 1
      %s167 = scalar_select %p166, %s18, 1
      %p168 = scmp.lt.s32.totalorder %s19, 0
      %s169 = scalar_select %p168, %s19, 0
      %s170 = smul.addr %s167, 6
      %s171 = sadd.s32 %s169, %s170
      %s172 = smul.addr %s171, 4
      %s173 = scalar_lea.vmem %s2, %s172
      %p174 = pneg %p91
      %p175 = pneg %p88
      %p176 = pneg %p119
      %p177 = pneg %p116
      %p178 = scmp.lt.s32.totalorder %s18, 1
      %s179 = scalar_select %p178, %s18, 1
      %p180 = scmp.lt.s32.totalorder %s19, 0
      %s181 = scalar_select %p180, %s19, 0
      %s182 = smul.addr %s179, 2
      %s183 = sadd.s32 %s181, %s182
      %s184 = smul.addr %s183, 4
      %s185 = scalar_lea.vmem %s3, %s184
      %p186 = scmp.lt.s32.totalorder %s18, 1
      %s187 = scalar_select %p186, %s18, 1
      %p188 = scmp.lt.s32.totalorder %s19, 0
      %s189 = scalar_select %p188, %s19, 0
      %s190 = smul.addr %s187, 6
      %s191 = sadd.s32 %s189, %s190
      %s192 = smul.addr %s191, 4
      %s193 = scalar_lea.vmem %s2, %s192
      %p194 = scmp.lt.s32.totalorder %s18, 1
      %s195 = scalar_select %p194, %s18, 1
      %p196 = scmp.lt.s32.totalorder %s19, 0
      %s197 = scalar_select %p196, %s19, 0
      %s198 = smul.addr %s195, 2
      %s199 = sadd.s32 %s197, %s198
      %s200 = smul.addr %s199, 4
      %s201 = scalar_lea.vmem %s3, %s200
      %v203 = vld [vmem:[%s0] sm:$0xf]
      %v204 = vld [vmem:[%s0 + $0x4] sm:$0xf]
      %v205 = vld [vmem:[%s193] sm:$0xf]
      %v206 = vld [vmem:[%s193 + $0x4] sm:$0xf]
      %v207 = vld [vmem:[%s193 + $0x8] sm:$0xf]
      %v208 = vld [vmem:[%s193 + $0xc] sm:$0xf]
      %v209 = vld [vmem:[%s193 + $0x10] sm:$0xf]
      %v210 = vld [vmem:[%s193 + $0x14] sm:$0xf]
      %v211 = vld [vmem:[%s1] sm:$0xff]
      %v212 = vld [vmem:[%s1 + $0x8] sm:$0xff]
      %214 = vset.pattern.permute.xlu0 0
      %215 = vperm.xlu0 %214, %v211
      %v216 = vpop.permute.xlu0 %215
      %219 = vset.pattern.permute.xlu0 0
      %220 = vperm.xlu0 %219, %v212
      %v221 = vpop.permute.xlu0 %220
      %v225 = vunpack.c.l.b16 %v203
      %v226 = vunpack.c.l.b16 %v204
      %v227 = vpack.c.b16 %v226, %v225
      %v234 = vunpack.c.l.b16 %v205
      %v235 = vunpack.c.l.b16 %v206
      %v236 = vunpack.c.l.b16 %v207
      %v237 = vunpack.c.l.b16 %v208
      %v238 = vunpack.c.l.b16 %v209
      %v239 = vunpack.c.l.b16 %v210
      %v240 = vpack.c.b16 %v235, %v234
      %v241 = vpack.c.b16 %v237, %v236
      %v242 = vpack.c.b16 %v239, %v238
      %vm246 = vcmask 392192
      %v248 = vsel %vm246, %v227, 0
      %250 = vmatpush.bf16.msra.mxu0 0
      %251 = vmatpush.bf16.msra.mxu0 0
      %252 = vmatpush.bf16.msra.mxu0 0
      %253 = vmatpush.bf16.msra.mxu0 0
      %254 = vmatpush.bf16.msra.mxu0 0
      %255 = vmatpush.bf16.msra.mxu0 %v242
      %256 = vmatpush.bf16.msra.mxu0 %v241
      %257 = vmatpush.bf16.msra.mxu0 %v240
      %258 = vmatmul.bf16.gmra.mxu0 %v248
      %v259 = vpop.f32.mrf.mxu0
      %v260 = vadd.f32 %v216, %v259
      %v261 = vpop.f32.mrf.mxu0
      %v262 = vadd.f32 %v221, %v261
      %263 = vdwg.mxu0
      %v264 = vpack.c.bf16 %v260, %v260
      %v265 = vpack.c.bf16 %v262, %v262
      %vm266 = vcmask 125952
      %267 = vst.msk [vmem:[%s201] sm:$0xf] %vm266, %v264
      %268 = vst.msk [vmem:[%s201 + $0x4] sm:$0xf] %vm266, %v265
      %p269 = scmp.lt.s32.totalorder %s18, 1
      %s270 = scalar_select %p269, %s18, 1
      %p271 = scmp.lt.s32.totalorder %s19, 0
      %s272 = scalar_select %p271, %s19, 0
      %s273 = smul.addr %s270, 2
      %s274 = sadd.s32 %s272, %s273
      %s275 = smul.addr %s274, 4
      %s276 = scalar_lea.vmem %s3, %s275
      // Predicated region
      $region33: #{model_forward.2} parent=31 // pred_check
        %p277 = pneg %p116
      $region34: #{model_forward.2} parent=31 // pred_check_branch
        %279 = sbr.rel (%p277) target = $region36
      $region35: #{model_forward.2} parent=31 // pred_region
        _
      $region36: #{model_forward.2} parent=31 // pred_fallthru
        _
    $region32: #{model_forward.2} parent=5 // pred_fallthru
      _
    %p280 = scmp.le.s32.totalorder 2, %s9
    // Predicated region
    $region37: #{model_forward.2} parent=5 // pred_check
      %p281 = pneg %p280
    $region38: #{model_forward.2} parent=5 // pred_check_branch
      %283 = sbr.rel (%p281) target = $region40
    $region39: #{model_forward.2} parent=5 // pred_region
      %s284 = ssub.s32 %s9, 2
      // Predicated region
      $region41: #{model_forward.2} parent=39 // pred_check
        %p285 = pneg %p122
      $region42: #{model_forward.2} parent=39 // pred_check_branch
        %287 = sbr.rel (%p285) target = $region44
      $region43: #{model_forward.2} parent=39 // pred_region
        %p288 = scmp.lt.s32.totalorder %s20, 1
        %s289 = scalar_select %p288, %s20, 1
        %p290 = scmp.lt.s32.totalorder %s21, 0
        %s291 = scalar_select %p290, %s21, 0
        %s292 = smul.addr %s289, 2
        %s293 = sadd.s32 %s291, %s292
        %s294 = smul.addr %s293, 4
        %s295 = scalar_lea.vmem %s3, %s294
      $region44: #{model_forward.2} parent=39 // pred_fallthru
        _
    $region40: #{model_forward.2} parent=5 // pred_fallthru
      _
  $region6: #{model_forward.2} parent=0 // loop_footer
    %s13 = sadd.s32 1, %s9
  $region7: #{model_forward.2} parent=0 // loop_footer_branch
    %8 = sbr.rel target = $region3
  $region8: #{model_forward.2} parent=0 // loop_exit
    _

// kernel: model_forward.3
$region0: #{model_forward.3}
  #allocation0 [shape = 'u32[]', space=smem, size = 0x4, offset = 0x4, fixed_abs, tag = 'smem constant byte address 0x4 - core index']
  #allocation1 [shape = 'u32[72,128]{1,0:T(1,128)}', space=vmem, size = 0x9000, scoped, tag = 'internal scratch']
  %s0 = inlined_call_operand.vmem [shape: bf16[16,4], index: 0, kind: input, shape index: {}]
  %s1 = inlined_call_operand.vmem [shape: bf16[4,16], index: 1, kind: input, shape index: {}]
  %s2 = inlined_call_operand.vmem [shape: bf16[32,4,4], index: 2, kind: input, shape index: {}]
  %s3 = inlined_call_operand.hbm [shape: f32[32,16,16], index: 3, kind: output, shape index: {}]
  %s4 = sld [smem:[#allocation0]]
  $region45: #{model_forward.3} parent=0
    _
  %s6 = ssub.s32 1, %s4
  %s7 = scalar_select 0, %s6, %s4
  $region1: #{model_forward.3} parent=0
    #allocation2 [shape = 'u8[16384]{0}', space=vmem, size = 0x4000, scoped, tag = 'output window, operand 0']
    #allocation3 [shape = 's32[2]{0}', space=sflag, size = 0x8, scoped, tag = 'scoped memory for model_forward.3']
    %8 = vsyncpa [#allocation3], 0
    %s9 = scalar_lea.sflag [#allocation3], 1
    %10 = vsyncpa %s9, 0
    loop: start=0, step=1, limit=34
    $region2: #{model_forward.3} parent=1 // loop_pre_header
      _
    $region3: #{model_forward.3} parent=1 // loop_header
      %s12 = sphi 0, %s16
      %p13 = scmp.ge.s32.totalorder %s12, 34
      %s19 = sphi 0, %s31
      %s20 = sphi 0, %s27
      %s21 = sphi 0, %s19
      %s22 = sphi 0, %s20
      %s23 = sphi 0, %s21
      %s24 = sphi 0, %s22
      %s34 = sphi 0, %s36
      %s37 = sphi 0, %s34
      %s38 = sphi 0, %s37
      %s54 = sphi 0, %s38
      %s58 = sphi 0, %s58
      %s60 = sphi 0, %s58
      %s61 = sphi 0, %s60
      %s75 = sphi 0, %s61
      %s81 = sphi 0, %s83
      %s84 = sphi 0, %s81
      %s85 = sphi 0, %s84
      %s101 = sphi 0, %s85
      %s109 = sphi 0, %s111
      %s112 = sphi 0, %s109
      %s113 = sphi 0, %s112
      %s129 = sphi 0, %s113
    $region4: #{model_forward.3} parent=1 // loop_header_branch
      %15 = sbr.rel (%p13) target = $region8
    $region5: #{model_forward.3} parent=1 // loop_body
      %s17 = ssub.s32 %s12, 1
      %s18 = ssub.s32 %s12, 2
      %s25 = sadd.s32 1, %s20
      %p26 = scmp.ge.s32.totalorder %s25, 1
      %s27 = scalar_select %p26, 0, %s25
      %s28 = sadd.s32 1, %s19
      %s29 = scalar_select %p26, %s28, %s19
      %p30 = scmp.ge.s32.totalorder %s29, 32
      %s31 = scalar_select %p30, 0, %s29
      %s32 = ssub.s32 %s20, %s27
      %p33 = scmp.eq.s32.totalorder %s32, 0
      %s35 = sadd.s32 %s34, 1
      %s36 = scalar_select %p33, %s34, %s35
      %p39 = pneg %p33
      %p40 = scmp.eq.s32.totalorder %s12, 31
      %p41 = por %p39, %p40
      %p42 = scmp.ne.s32.totalorder %s34, %s37
      %p43 = scmp.eq.s32.totalorder %s12, 0
      %p44 = por %p42, %p43
      %p45 = scmp.ne.s32.totalorder %s34, %s37
      %p46 = scmp.eq.s32.totalorder %s17, 31
      %p47 = por %p45, %p46
      %p48 = scmp.ne.s32.totalorder %s37, %s38
      %p49 = scmp.eq.s32.totalorder %s17, 0
      %p50 = por %p48, %p49
      %p51 = scmp.ne.s32.totalorder %s37, %s38
      %p52 = scmp.eq.s32.totalorder %s18, 31
      %p53 = por %p51, %p52
      %p55 = scmp.ne.s32.totalorder %s38, %s54
      %p56 = scmp.eq.s32.totalorder %s18, 0
      %p57 = por %p55, %p56
      %s59 = sadd.s32 %s58, 1
      %p62 = scmp.eq.s32.totalorder %s12, 31
      %p63 = scmp.ne.s32.totalorder %s58, %s60
      %p64 = scmp.eq.s32.totalorder %s12, 0
      %p65 = por %p63, %p64
      %p66 = scmp.ne.s32.totalorder %s58, %s60
      %p67 = scmp.eq.s32.totalorder %s17, 31
      %p68 = por %p66, %p67
      %p69 = scmp.ne.s32.totalorder %s60, %s61
      %p70 = scmp.eq.s32.totalorder %s17, 0
      %p71 = por %p69, %p70
      %p72 = scmp.ne.s32.totalorder %s60, %s61
      %p73 = scmp.eq.s32.totalorder %s18, 31
      %p74 = por %p72, %p73
      %p76 = scmp.ne.s32.totalorder %s61, %s75
      %p77 = scmp.eq.s32.totalorder %s18, 0
      %p78 = por %p76, %p77
      %s79 = ssub.s32 %s19, %s31
      %p80 = scmp.eq.s32.totalorder %s79, 0
      %s82 = sadd.s32 %s81, 1
      %s83 = scalar_select %p80, %s81, %s82
      %p86 = pneg %p80
      %p87 = scmp.eq.s32.totalorder %s12, 31
      %p88 = por %p86, %p87
      %p89 = scmp.ne.s32.totalorder %s81, %s84
      %p90 = scmp.eq.s32.totalorder %s12, 0
      %p91 = por %p89, %p90
      %p92 = scmp.ne.s32.totalorder %s81, %s84
      %p93 = scmp.eq.s32.totalorder %s17, 31
      %p94 = por %p92, %p93
      %p95 = scmp.ne.s32.totalorder %s84, %s85
      %p96 = scmp.eq.s32.totalorder %s17, 0
      %p97 = por %p95, %p96
      %p98 = scmp.ne.s32.totalorder %s84, %s85
      %p99 = scmp.eq.s32.totalorder %s18, 31
      %p100 = por %p98, %p99
      %p102 = scmp.ne.s32.totalorder %s85, %s101
      %p103 = scmp.eq.s32.totalorder %s18, 0
      %p104 = por %p102, %p103
      %s105 = ssub.s32 %s19, %s31
      %s106 = ssub.s32 %s20, %s27
      %s107 = sor.u32 %s105, %s106
      %p108 = scmp.eq.s32.totalorder %s107, 0
      %s110 = sadd.s32 %s109, 1
      %s111 = scalar_select %p108, %s109, %s110
      %p114 = pneg %p108
      %p115 = scmp.eq.s32.totalorder %s12, 31
      %p116 = por %p114, %p115
      %p117 = scmp.ne.s32.totalorder %s109, %s112
      %p118 = scmp.eq.s32.totalorder %s12, 0
      %p119 = por %p117, %p118
      %p120 = scmp.ne.s32.totalorder %s109, %s112
      %p121 = scmp.eq.s32.totalorder %s17, 31
      %p122 = por %p120, %p121
      %p123 = scmp.ne.s32.totalorder %s112, %s113
      %p124 = scmp.eq.s32.totalorder %s17, 0
      %p125 = por %p123, %p124
      %p126 = scmp.ne.s32.totalorder %s112, %s113
      %p127 = scmp.eq.s32.totalorder %s18, 31
      %p128 = por %p126, %p127
      %p130 = scmp.ne.s32.totalorder %s113, %s129
      %p131 = scmp.eq.s32.totalorder %s18, 0
      %p132 = por %p130, %p131
      %p133 = scmp.le.s32.totalorder 1, %s12
      %p134 = scmp.lt.s32.totalorder %s12, 33
      %p135 = pnand %p133, %p134
      %p136 = pneg %p135
      // Predicated region
      $region9: #{model_forward.3} parent=5 // pred_check
        _
      $region10: #{model_forward.3} parent=5 // pred_check_branch
        %138 = sbr.rel (%p135) target = $region12
      $region11: #{model_forward.3} parent=5 // pred_region
        %s139 = ssub.s32 %s12, 1
        // Predicated region
        $region13: #{model_forward.3} parent=11 // pred_check
          %p140 = pneg %p50
        $region14: #{model_forward.3} parent=11 // pred_check_branch
          %142 = sbr.rel (%p140) target = $region16
        $region15: #{model_forward.3} parent=11 // pred_region
          %s143 = smul.u32 2, %s22
          %p144 = scmp.lt.s32.totalorder %s143, 1
          %s145 = scalar_select %p144, %s143, 1
          %s146 = smul.addr %s145, 4
          %s147 = scalar_lea.vmem %s0, %s146
          %s148 = smul.u32 2, %s22
        $region16: #{model_forward.3} parent=11 // pred_fallthru
          _
        // Predicated region
        $region17: #{model_forward.3} parent=11 // pred_check
          %p149 = pneg %p71
        $region18: #{model_forward.3} parent=11 // pred_check_branch
          %151 = sbr.rel (%p149) target = $region20
        $region19: #{model_forward.3} parent=11 // pred_region
          _
        $region20: #{model_forward.3} parent=11 // pred_fallthru
          _
      $region12: #{model_forward.3} parent=5 // pred_fallthru
        _
      %p152 = scmp.lt.s32.totalorder %s12, 32
      // Predicated region
      $region21: #{model_forward.3} parent=5 // pred_check
        %p153 = pneg %p152
      $region22: #{model_forward.3} parent=5 // pred_check_branch
        %155 = sbr.rel (%p153) target = $region24
      $region23: #{model_forward.3} parent=5 // pred_region
        // Predicated region
        $region25: #{model_forward.3} parent=23 // pred_check
          %p156 = pneg %p91
        $region26: #{model_forward.3} parent=23 // pred_check_branch
          %158 = sbr.rel (%p156) target = $region28
        $region27: #{model_forward.3} parent=23 // pred_region
          %p159 = scmp.lt.s32.totalorder %s19, 31
          %s160 = scalar_select %p159, %s19, 31
          %s161 = smul.addr %s160, 2
          %s162 = scalar_lea.vmem %s2, %s161
        $region28: #{model_forward.3} parent=23 // pred_fallthru
          _
      $region24: #{model_forward.3} parent=5 // pred_fallthru
        _
      %p163 = scmp.le.s32.totalorder 1, %s12
      %p164 = scmp.lt.s32.totalorder %s12, 33
      %p165 = pnand %p163, %p164
      %p166 = pneg %p165
      // Predicated region
      $region29: #{model_forward.3} parent=5 // pred_check
        _
      $region30: #{model_forward.3} parent=5 // pred_check_branch
        %168 = sbr.rel (%p165) target = $region32
      $region31: #{model_forward.3} parent=5 // pred_region
        %s169 = ssub.s32 %s12, 1
        %s170 = smul.u32 2, %s22
        %p171 = scmp.lt.s32.totalorder %s170, 1
        %s172 = scalar_select %p171, %s170, 1
        %s173 = smul.addr %s172, 4
        %s174 = scalar_lea.vmem %s0, %s173
        %p175 = pneg %p50
        %p176 = pneg %p47
        %p177 = pneg %p71
        %p178 = pneg %p68
        %p179 = scmp.lt.s32.totalorder %s21, 31
        %s180 = scalar_select %p179, %s21, 31
        %s181 = smul.addr %s180, 2
        %s182 = scalar_lea.vmem %s2, %s181
        %p183 = pneg %p97
        %p184 = pneg %p94
        %p185 = pneg %p125
        %p186 = pneg %p122
        %s187 = sand.u32 %s112, 1
        %s188 = scalar_lea.sflag [#allocation3], %s187
        %s189 = sand.u32 %s112, 1
        %s190 = smul.addr %s189, 16
        %s191 = scalar_lea.vmem [#allocation2], %s190
        %s192 = smul.u32 2, %s22
        %p193 = scmp.lt.s32.totalorder %s192, 1
        %s194 = scalar_select %p193, %s192, 1
        %s195 = smul.addr %s194, 4
        %s196 = scalar_lea.vmem %s0, %s195
        %s197 = smul.u32 2, %s22
        %p198 = scmp.lt.s32.totalorder %s21, 31
        %s199 = scalar_select %p198, %s21, 31
        %s200 = smul.addr %s199, 2
        %s201 = scalar_lea.vmem %s2, %s200
        %s202 = smul.u32 2, %s22
        %v204 = vld [vmem:[%s196] sm:$0xf]
        %v205 = vld [vmem:[%s196 + $0x4] sm:$0xf]
        %v206 = vld [vmem:[%s201] sm:$0x3]
        %v209 = vunpack.c.l.b16 %v204
        %v210 = vunpack.c.l.b16 %v205
        %v211 = vpack.c.b16 %v210, %v209
        %vm212 = vcmask 31744
        %v214 = vsel %vm212, %v211, 0
        %vm216 = vcmask 1041408
        %v218 = vsel %vm216, %v206, 0
        %220 = vmatpush.bf16.msra.mxu0 0
        %221 = vmatpush.bf16.msra.mxu0 0
        %222 = vmatpush.bf16.msra.mxu0 0
        %223 = vmatpush.bf16.msra.mxu0 0
        %224 = vmatpush.bf16.msra.mxu0 0
        %225 = vmatpush.bf16.msra.mxu0 0
        %226 = vmatpush.bf16.msra.mxu0 0
        %227 = vmatpush.bf16.msra.mxu0 %v218
        %228 = vmatmul.bf16.gmra.mxu0 %v214
        %v229 = vpop.f32.mrf.mxu0
        %v230 = vadd.f32 0.0, %v229
        %v231 = vpop.f32.mrf.mxu0
        %v232 = vadd.f32 0.0, %v231
        %233 = vdwg.mxu0
        %v234 = vpack.c.bf16 %v232, %v230
        %v235 = vld [vmem:[%s1] sm:$0x3]
        %v237 = vsel %vm212, %v234, 0
        %v240 = vsel %vm216, %v235, 0
        %242 = vmatpush.bf16.msra.mxu0 0
        %243 = vmatpush.bf16.msra.mxu0 0
        %244 = vmatpush.bf16.msra.mxu0 0
        %245 = vmatpush.bf16.msra.mxu0 0
        %246 = vmatpush.bf16.msra.mxu0 0
        %247 = vmatpush.bf16.msra.mxu0 0
        %248 = vmatpush.bf16.msra.mxu0 0
        %249 = vmatpush.bf16.msra.mxu0 %v240
        %250 = vmatmul.bf16.gmra.mxu0 %v237
        %v251 = vpop.f32.mrf.mxu0
        %v252 = vadd.f32 0.0, %v251
        %v253 = vpop.f32.mrf.mxu0
        %v254 = vadd.f32 0.0, %v253
        %255 = vdwg.mxu0
        %vm256 = vcmask 130048
        %257 = vst.msk [vmem:[%s191] sm:$0xff] %vm256, %v252
        %258 = vst.msk [vmem:[%s191 + $0x8] sm:$0xff] %vm256, %v254
        %s259 = sand.u32 %s112, 1
        %s260 = scalar_lea.sflag [#allocation3], %s259
        %s261 = sand.u32 %s112, 1
        %s262 = smul.addr %s261, 16
        %s263 = scalar_lea.vmem [#allocation2], %s262
        // Predicated region
        $region33: #{model_forward.3} parent=31 // pred_check
          %p264 = pneg %p122
        $region34: #{model_forward.3} parent=31 // pred_check_branch
          %266 = sbr.rel (%p264) target = $region36
        $region35: #{model_forward.3} parent=31 // pred_region
          %s267 = smul.u32 2, %s22
          %269 = vsyncadd %s260, 0
          %s270 = smul.addr %s21, 2
          %s271 = sadd.s32 %s267, %s270
          %s272 = smul.addr %s271, 8
          %s273 = scalar_lea.hbm %s3, %s272
          %s274 = sshll.u32 %s263, 4
          %s275 = int_to_ptr.vmem [resolvable:$true] %s274
          %s276 = sshll.u32 %s273, 4
          %s277 = int_to_ptr.hbm [resolvable:$true] %s276
          %282 = dma.vmem_to_hbm [thread:$0]  %s275, 256, %s277, %s260, 128, 128, 8
        $region36: #{model_forward.3} parent=31 // pred_fallthru
          _
      $region32: #{model_forward.3} parent=5 // pred_fallthru
        _
      %p283 = scmp.le.s32.totalorder 2, %s12
      // Predicated region
      $region37: #{model_forward.3} parent=5 // pred_check
        %p284 = pneg %p283
      $region38: #{model_forward.3} parent=5 // pred_check_branch
        %286 = sbr.rel (%p284) target = $region40
      $region39: #{model_forward.3} parent=5 // pred_region
        %s287 = ssub.s32 %s12, 2
        // Predicated region
        $region41: #{model_forward.3} parent=39 // pred_check
          %p288 = pneg %p128
        $region42: #{model_forward.3} parent=39 // pred_check_branch
          %290 = sbr.rel (%p288) target = $region44
        $region43: #{model_forward.3} parent=39 // pred_region
          %s291 = sand.u32 %s113, 1
          %s292 = scalar_lea.sflag [#allocation3], %s291
          %s293 = sand.u32 %s113, 1
          %s294 = smul.addr %s293, 16
          %s295 = scalar_lea.vmem [#allocation2], %s294
          %297 = dma.done %s292, 256
        $region44: #{model_forward.3} parent=39 // pred_fallthru
          _
      $region40: #{model_forward.3} parent=5 // pred_fallthru
        _
    $region6: #{model_forward.3} parent=1 // loop_footer
      %s16 = sadd.s32 1, %s12
    $region7: #{model_forward.3} parent=1 // loop_footer_branch
      %11 = sbr.rel target = $region3
    $region8: #{model_forward.3} parent=1 // loop_exit
      _
    %298 = vsyncpa [#allocation3], 1
    %s299 = scalar_lea.sflag [#allocation3], 1
    %300 = vsyncpa %s299, 1

</llo_original>
